<compile_context>
chip_gen: v7x
topology: tpu7x:2x2x1
jax: 0.10.0
libtpu: 0.0.40
codegen_flags: <defaults>
</compile_context>

<pallas_src>
import functools
import math

import jax
import jax.numpy as jnp
from jax.experimental import pallas as pl
from jax.experimental.pallas import tpu as pltpu


def _round_up(x: int, m: int) -> int:
    return ((x + m - 1) // m) * m


def _flash_attn_kernel(vl_ref, q_ref, k_ref, v_ref, o_ref,
                       m_sc, l_sc, acc_sc, *,
                       sm_scale, tk, k_real, masked, pad_k):
    # vl_ref: (B,) int32 in SMEM (scalar prefetch)
    # q_ref: (1, tq, Dp)   k_ref: (1, tk, Dp)   v_ref: (1, tk, Dvp)
    # o_ref: (1, tq, Dvp)  scratch: m/l (tq,1) f32, acc (tq, Dvp) f32
    b = pl.program_id(0)
    kt = pl.program_id(2)
    n_kt = pl.num_programs(2)

    @pl.when(kt == 0)
    def _init():
        m_sc[...] = jnp.full_like(m_sc, -jnp.inf)
        l_sc[...] = jnp.zeros_like(l_sc)
        acc_sc[...] = jnp.zeros_like(acc_sc)

    if masked:
        vl = vl_ref[b]
        k_start = kt * tk

    def _compute():
        q = q_ref[0]            # (tq, Dp)  -- input dtype, MXU-friendly
        k = k_ref[0]            # (tk, Dp)
        v = v_ref[0]            # (tk, Dvp)

        # scores tile = q @ k^T / sqrt(d), f32 accumulation on the MXU.
        s = jax.lax.dot_general(
            q, k, (((1,), (1,)), ((), ())),
            preferred_element_type=jnp.float32) * jnp.float32(sm_scale)

        if masked:
            # sequence mask: key positions >= valid_len -> -1e6 (as in d2l).
            key_idx = k_start + jax.lax.broadcasted_iota(jnp.int32, s.shape, 1)
            s = jnp.where(key_idx < vl, s, jnp.float32(-1.0e6))
            if pad_k:
                # padded key columns contribute nothing even in the vl<=0
                # (uniform-weights) degenerate case.
                s = jnp.where(key_idx < k_real, s, -jnp.inf)

        # online softmax update
        m_prev = m_sc[...]                                          # (tq, 1)
        m_new = jnp.maximum(m_prev, jnp.max(s, axis=-1, keepdims=True))
        alpha = jnp.exp(m_prev - m_new)
        p = jnp.exp(s - m_new)                                      # (tq, tk)

        l_sc[...] = alpha * l_sc[...] + jnp.sum(p, axis=-1, keepdims=True)
        acc_sc[...] = alpha * acc_sc[...] + jnp.dot(
            p.astype(v.dtype), v, preferred_element_type=jnp.float32)
        m_sc[...] = m_new

    if masked:
        # Skip K tiles that are entirely masked: with the -1e6 mask their
        # softmax contribution underflows to exactly 0, so skipping is exact
        # for vl > 0. vl <= 0 is the degenerate "all masked -> uniform
        # weights" case, so then every tile is processed.
        pl.when(jnp.logical_or(k_start < vl, vl <= 0))(_compute)
    else:
        _compute()

    @pl.when(kt == n_kt - 1)
    def _finalize():
        inv_l = pl.reciprocal(l_sc[...], approx=True)   # EUP slot, once/row
        o_ref[0] = (acc_sc[...] * inv_l).astype(o_ref.dtype)


def dot_product_attention(queries, keys, values, valid_lens=None, *,
                          tq=256, tk=256):
    """Pallas TPU implementation of DotProductAttention.forward (eval mode).

    Default tiles (tq=tk=256) are sized for v7x's 64 MiB VMEM; on v6e/v5e
    they can be raised to 512 for slightly better roofline utilization.
    """
    B, Q, D = queries.shape
    Bk, K, Dk = keys.shape
    Bv, Kv, Dv = values.shape
    assert D == Dk, "queries/keys feature dims must match"
    assert B == Bk == Bv and K == Kv, "batch/key dims must match"

    out_dtype = queries.dtype

    # ---- tile / padding plan (block last-two dims must be (8,128)-aligned) --
    tq_ = min(_round_up(tq, 8), _round_up(Q, 8))
    tk_ = min(_round_up(tk, 8), _round_up(K, 8))
    Qp = _round_up(Q, tq_)
    Kp = _round_up(K, tk_)
    Dp = _round_up(D, 128)
    Dvp = _round_up(Dv, 128)          # lane-dense output last dim

    qp = jnp.pad(queries, ((0, 0), (0, Qp - Q), (0, Dp - D)))
    kp = jnp.pad(keys, ((0, 0), (0, Kp - K), (0, Dp - D)))
    vp = jnp.pad(values, ((0, 0), (0, Kp - K), (0, Dvp - Dv)))

    pad_k = Kp > K
    masked = (valid_lens is not None) or pad_k

    if valid_lens is None:
        vl = jnp.full((B,), K, dtype=jnp.int32)   # padded keys stay masked
    else:
        vl = valid_lens.astype(jnp.int32)

    grid = (B, Qp // tq_, Kp // tk_)

    grid_spec = pltpu.PrefetchScalarGridSpec(
        num_scalar_prefetch=1,
        grid=grid,
        in_specs=[
            pl.BlockSpec((1, tq_, Dp), lambda b, qi, ki, vl_ref: (b, qi, 0)),
            pl.BlockSpec((1, tk_, Dp), lambda b, qi, ki, vl_ref: (b, ki, 0)),
            pl.BlockSpec((1, tk_, Dvp), lambda b, qi, ki, vl_ref: (b, ki, 0)),
        ],
        out_specs=pl.BlockSpec((1, tq_, Dvp), lambda b, qi, ki, vl_ref: (b, qi, 0)),
        scratch_shapes=[
            pltpu.VMEM((tq_, 1), jnp.float32),    # running max m
            pltpu.VMEM((tq_, 1), jnp.float32),    # running denom l
            pltpu.VMEM((tq_, Dvp), jnp.float32),  # running numerator acc
        ],
    )

    itemsize = jnp.dtype(out_dtype).itemsize
    cost = pl.CostEstimate(
        flops=2 * B * Qp * Kp * Dp + 2 * B * Qp * Kp * Dvp,
        transcendentals=B * Qp * Kp,
        bytes_accessed=(qp.size * qp.dtype.itemsize
                        + kp.size * kp.dtype.itemsize
                        + vp.size * vp.dtype.itemsize
                        + B * Qp * Dvp * itemsize),
    )

    kernel = functools.partial(
        _flash_attn_kernel, sm_scale=1.0 / math.sqrt(D), tk=tk_,
        k_real=K, masked=masked, pad_k=pad_k)

    out_p = pl.pallas_call(
        kernel,
        out_shape=jax.ShapeDtypeStruct((B, Qp, Dvp), out_dtype),
        grid_spec=grid_spec,
        compiler_params=pltpu.CompilerParams(
            dimension_semantics=("parallel", "parallel", "arbitrary"),
        ),
        cost_estimate=cost,
    )(vl, qp, kp, vp)

    return out_p[:, :Q, :Dv]


def _reference(queries, keys, values, valid_lens):
    """Pure-JAX reference mirroring the PyTorch module (eval mode)."""
    d = queries.shape[-1]
    scores = jnp.einsum("bqd,bkd->bqk", queries.astype(jnp.float32),
                        keys.astype(jnp.float32)) / math.sqrt(d)
    if valid_lens is None:
        w = jax.nn.softmax(scores, axis=-1)
    else:
        B, Q, K = scores.shape
        key_idx = jnp.arange(K)[None, None, :]
        mask = key_idx < valid_lens[:, None, None]
        masked = jnp.where(mask, scores, -1.0e6)
        w = jax.nn.softmax(masked, axis=-1)
    return jnp.einsum("bqk,bkv->bqv", w, values.astype(jnp.float32))


if __name__ == "__main__":
    key = jax.random.PRNGKey(0)

    # --- test 1: the d2l example shapes (consistent D=2 for q/k) ------------
    kq, kk, kv = jax.random.split(key, 3)
    B, Q, K, D, Dv = 2, 1, 10, 2, 4
    queries = jax.random.normal(kq, (B, Q, D), dtype=jnp.float32)
    keys = jax.random.normal(kk, (B, K, D), dtype=jnp.float32)
    values = jax.random.normal(kv, (B, K, Dv), dtype=jnp.float32)
    valid_lens = jnp.array([2, 6], dtype=jnp.int32)

    out = jax.block_until_ready(
        dot_product_attention(queries, keys, values, valid_lens))
    ref = _reference(queries, keys, values, valid_lens)
    assert out.shape == (B, Q, Dv)
    # tolerance accounts for the approximate EUP reciprocal used to normalize
    assert jnp.allclose(out, ref, atol=2e-3, rtol=2e-3), "mismatch (test 1)"

    # --- test 2: padded / multi-K-tile path with ragged valid_lens ----------
    k2 = jax.random.PRNGKey(1)
    kq2, kk2, kv2 = jax.random.split(k2, 3)
    B2, Q2, K2, D2, Dv2 = 2, 5, 40, 24, 20
    q2 = jax.random.normal(kq2, (B2, Q2, D2), dtype=jnp.float32)
    key2 = jax.random.normal(kk2, (B2, K2, D2), dtype=jnp.float32)
    v2 = jax.random.normal(kv2, (B2, K2, Dv2), dtype=jnp.float32)
    vl2 = jnp.array([7, 33], dtype=jnp.int32)

    out2 = jax.block_until_ready(
        dot_product_attention(q2, key2, v2, vl2, tq=8, tk=16))
    ref2 = _reference(q2, key2, v2, vl2)
    assert out2.shape == (B2, Q2, Dv2)
    assert jnp.allclose(out2, ref2, atol=2e-3, rtol=2e-3), "mismatch (test 2)"

    # --- test 3: valid_lens=None (static no-mask fast path, K multiple of tk)
    k3 = jax.random.PRNGKey(2)
    kq3, kk3, kv3 = jax.random.split(k3, 3)
    B3, Q3, K3, D3, Dv3 = 2, 8, 32, 16, 8
    q3 = jax.random.normal(kq3, (B3, Q3, D3), dtype=jnp.float32)
    key3 = jax.random.normal(kk3, (B3, K3, D3), dtype=jnp.float32)
    v3 = jax.random.normal(kv3, (B3, K3, Dv3), dtype=jnp.float32)

    out3 = jax.block_until_ready(
        dot_product_attention(q3, key3, v3, None, tq=8, tk=16))
    ref3 = _reference(q3, key3, v3, None)
    assert out3.shape == (B3, Q3, Dv3)
    assert jnp.allclose(out3, ref3, atol=2e-3, rtol=2e-3), "mismatch (test 3)"

    print("KERNEL_OK")
</pallas_src>

<mosaic_0001>
module attributes {stable_mosaic.version = 11 : i64} {
  func.func @_flash_attn_kernel(%arg0: i32, %arg1: i32, %arg2: i32, %arg3: memref<2xi32, #tpu.memory_space<smem>>, %arg4: memref<1x8x128xf32, #tpu.memory_space<vmem>>, %arg5: memref<1x16x128xf32, #tpu.memory_space<vmem>>, %arg6: memref<1x16x128xf32, #tpu.memory_space<vmem>>, %arg7: memref<1x8x128xf32, #tpu.memory_space<vmem>>, %arg8: memref<8x1xf32, #tpu.memory_space<vmem>>, %arg9: memref<8x1xf32, #tpu.memory_space<vmem>>, %arg10: memref<8x128xf32, #tpu.memory_space<vmem>>) attributes {dimension_semantics = [#tpu.dimension_semantics<parallel>, #tpu.dimension_semantics<parallel>, #tpu.dimension_semantics<arbitrary>], iteration_bounds = array<i64: 2, 1, 1>, scalar_prefetch = 1 : i64, scratch_operands = 3 : i64, tpu.core_type = #tpu.core_type<tc>, window_params = [{transform_indices = @transform_0, window_bounds = array<i64: 1, 8, 128>}, {transform_indices = @transform_1, window_bounds = array<i64: 1, 16, 128>}, {transform_indices = @transform_2, window_bounds = array<i64: 1, 16, 128>}, {transform_indices = @transform_3, window_bounds = array<i64: 1, 8, 128>}]} {
    %c0_i32 = arith.constant 0 : i32
    %0 = arith.cmpi eq, %arg2, %c0_i32 : i32
    %1 = arith.extui %0 : i1 to i32
    %c0_i32_0 = arith.constant 0 : i32
    %2 = arith.cmpi ne, %1, %c0_i32_0 : i32
    scf.if %2 {
      %cst = arith.constant 0xFF800000 : f32
      %14 = vector.broadcast %cst : f32 to vector<8x1xf32>
      %c0 = arith.constant 0 : index
      %c0_5 = arith.constant 0 : index
      %15 = vector.load %arg8[%c0, %c0_5] : memref<8x1xf32, #tpu.memory_space<vmem>>, vector<8x1xf32>
      tpu.vector_store %arg8[%c0, %c0_5], %14 {strides = array<i32>} : memref<8x1xf32, #tpu.memory_space<vmem>>, vector<8x1xf32>,
      %cst_6 = arith.constant 0.000000e+00 : f32
      %16 = vector.broadcast %cst_6 : f32 to vector<8x1xf32>
      %c0_7 = arith.constant 0 : index
      %c0_8 = arith.constant 0 : index
      %17 = vector.load %arg9[%c0_7, %c0_8] : memref<8x1xf32, #tpu.memory_space<vmem>>, vector<8x1xf32>
      tpu.vector_store %arg9[%c0_7, %c0_8], %16 {strides = array<i32>} : memref<8x1xf32, #tpu.memory_space<vmem>>, vector<8x1xf32>,
      %cst_9 = arith.constant 0.000000e+00 : f32
      %18 = vector.broadcast %cst_9 : f32 to vector<8x128xf32>
      %c0_10 = arith.constant 0 : index
      %c0_11 = arith.constant 0 : index
      %19 = vector.load %arg10[%c0_10, %c0_11] : memref<8x128xf32, #tpu.memory_space<vmem>>, vector<8x128xf32>
      tpu.vector_store %arg10[%c0_10, %c0_11], %18 {strides = array<i32>} : memref<8x128xf32, #tpu.memory_space<vmem>>, vector<8x128xf32>,
    } else {
    }
    %3 = arith.index_cast %arg0 : i32 to index
    %4 = memref.load %arg3[%3] : memref<2xi32, #tpu.memory_space<smem>>
    %c16_i32 = arith.constant 16 : i32
    %5 = arith.muli %arg2, %c16_i32 : i32
    %6 = arith.cmpi slt, %5, %4 : i32
    %c0_i32_1 = arith.constant 0 : i32
    %7 = arith.cmpi sle, %4, %c0_i32_1 : i32
    %8 = arith.ori %6, %7 : i1
    %9 = arith.extui %8 : i1 to i32
    %c0_i32_2 = arith.constant 0 : i32
    %10 = arith.cmpi ne, %9, %c0_i32_2 : i32
    scf.if %10 {
      %c0 = arith.constant 0 : index
      %c0_5 = arith.constant 0 : index
      %c0_6 = arith.constant 0 : index
      %14 = vector.load %arg4[%c0, %c0_5, %c0_6] : memref<1x8x128xf32, #tpu.memory_space<vmem>>, vector<1x8x128xf32>
      %15 = vector.shape_cast %14 : vector<1x8x128xf32> to vector<8x128xf32>
      %c0_7 = arith.constant 0 : index
      %c0_8 = arith.constant 0 : index
      %c0_9 = arith.constant 0 : index
      %16 = vector.load %arg5[%c0_7, %c0_8, %c0_9] : memref<1x16x128xf32, #tpu.memory_space<vmem>>, vector<1x16x128xf32>
      %17 = vector.shape_cast %16 : vector<1x16x128xf32> to vector<16x128xf32>
      %c0_10 = arith.constant 0 : index
      %c0_11 = arith.constant 0 : index
      %c0_12 = arith.constant 0 : index
      %18 = vector.load %arg6[%c0_10, %c0_11, %c0_12] : memref<1x16x128xf32, #tpu.memory_space<vmem>>, vector<1x16x128xf32>
      %19 = vector.shape_cast %18 : vector<1x16x128xf32> to vector<16x128xf32>
      %cst = arith.constant dense<0.000000e+00> : vector<8x16xf32>
      %20 = tpu.matmul %15, %17, %cst {dimension_numbers = #tpu.dot_dimension_numbers<[1], [1], [0], [0], [0, 0, 1, 0], [], []>} : vector<8x128xf32>, vector<16x128xf32>, vector<8x16xf32> -> vector<8x16xf32>
      %cst_13 = arith.constant 0.707106769 : f32
      %21 = vector.broadcast %cst_13 : f32 to vector<8x16xf32>
      %22 = arith.mulf %20, %21 : vector<8x16xf32>
      %23 = tpu.iota {dimensions = array<i32: 1>} : vector<8x16xi32>
      %24 = vector.broadcast %5 : i32 to vector<8x16xi32>
      %25 = arith.addi %24, %23 : vector<8x16xi32>
      %26 = vector.broadcast %4 : i32 to vector<8x16xi32>
      %27 = arith.cmpi slt, %25, %26 : vector<8x16xi32>
      %cst_14 = arith.constant -1.000000e+06 : f32
      %28 = vector.broadcast %cst_14 : f32 to vector<8x16xf32>
      %29 = arith.select %27, %22, %28 : vector<8x16xi1>, vector<8x16xf32>
      %c10_i32 = arith.constant 10 : i32
      %30 = vector.broadcast %c10_i32 : i32 to vector<8x16xi32>
      %31 = arith.cmpi slt, %25, %30 : vector<8x16xi32>
      %cst_15 = arith.constant 0xFF800000 : f32
      %32 = vector.broadcast %cst_15 : f32 to vector<8x16xf32>
      %33 = arith.select %31, %29, %32 : vector<8x16xi1>, vector<8x16xf32>
      %c0_16 = arith.constant 0 : index
      %c0_17 = arith.constant 0 : index
      %34 = vector.load %arg8[%c0_16, %c0_17] : memref<8x1xf32, #tpu.memory_space<vmem>>, vector<8x1xf32>
      %cst_18 = arith.constant dense<0xFF800000> : vector<8xf32>
      %35 = vector.multi_reduction <maximumf>, %33, %cst_18 [1] : vector<8x16xf32> to vector<8xf32>
      %36 = vector.shape_cast %35 : vector<8xf32> to vector<8x1xf32>
      %37 = arith.maximumf %34, %36 : vector<8x1xf32>
      %38 = arith.subf %34, %37 : vector<8x1xf32>
      %39 = math.exp %38 : vector<8x1xf32>
      %40 = vector.broadcast %37 : vector<8x1xf32> to vector<8x16xf32>
      %41 = arith.subf %33, %40 : vector<8x16xf32>
      %42 = math.exp %41 : vector<8x16xf32>
      %c0_19 = arith.constant 0 : index
      %c0_20 = arith.constant 0 : index
      %43 = vector.load %arg9[%c0_19, %c0_20] : memref<8x1xf32, #tpu.memory_space<vmem>>, vector<8x1xf32>
      %44 = arith.mulf %39, %43 : vector<8x1xf32>
      %cst_21 = arith.constant dense<0.000000e+00> : vector<8xf32>
      %45 = vector.multi_reduction <add>, %42, %cst_21 [1] : vector<8x16xf32> to vector<8xf32>
      %46 = vector.shape_cast %45 : vector<8xf32> to vector<8x1xf32>
      %47 = arith.addf %44, %46 : vector<8x1xf32>
      %c0_22 = arith.constant 0 : index
      %c0_23 = arith.constant 0 : index
      %48 = vector.load %arg9[%c0_22, %c0_23] : memref<8x1xf32, #tpu.memory_space<vmem>>, vector<8x1xf32>
      tpu.vector_store %arg9[%c0_22, %c0_23], %47 {strides = array<i32>} : memref<8x1xf32, #tpu.memory_space<vmem>>, vector<8x1xf32>,
      %c0_24 = arith.constant 0 : index
      %c0_25 = arith.constant 0 : index
      %49 = vector.load %arg10[%c0_24, %c0_25] : memref<8x128xf32, #tpu.memory_space<vmem>>, vector<8x128xf32>
      %50 = vector.broadcast %39 : vector<8x1xf32> to vector<8x128xf32>
      %51 = arith.mulf %50, %49 : vector<8x128xf32>
      %cst_26 = arith.constant dense<0.000000e+00> : vector<8x128xf32>
      %52 = tpu.matmul %42, %19, %cst_26 {dimension_numbers = #tpu.dot_dimension_numbers<[1], [0], [0], [1], [0, 0, 1, 1], [], []>} : vector<8x16xf32>, vector<16x128xf32>, vector<8x128xf32> -> vector<8x128xf32>
      %53 = arith.addf %51, %52 : vector<8x128xf32>
      %c0_27 = arith.constant 0 : index
      %c0_28 = arith.constant 0 : index
      %54 = vector.load %arg10[%c0_27, %c0_28] : memref<8x128xf32, #tpu.memory_space<vmem>>, vector<8x128xf32>
      tpu.vector_store %arg10[%c0_27, %c0_28], %53 {strides = array<i32>} : memref<8x128xf32, #tpu.memory_space<vmem>>, vector<8x128xf32>,
      %c0_29 = arith.constant 0 : index
      %c0_30 = arith.constant 0 : index
      %55 = vector.load %arg8[%c0_29, %c0_30] : memref<8x1xf32, #tpu.memory_space<vmem>>, vector<8x1xf32>
      tpu.vector_store %arg8[%c0_29, %c0_30], %37 {strides = array<i32>} : memref<8x1xf32, #tpu.memory_space<vmem>>, vector<8x1xf32>,
    } else {
    }
    %c0_i32_3 = arith.constant 0 : i32
    %11 = arith.cmpi eq, %arg2, %c0_i32_3 : i32
    %12 = arith.extui %11 : i1 to i32
    %c0_i32_4 = arith.constant 0 : i32
    %13 = arith.cmpi ne, %12, %c0_i32_4 : i32
    scf.if %13 {
      %c0 = arith.constant 0 : index
      %c0_5 = arith.constant 0 : index
      %14 = vector.load %arg9[%c0, %c0_5] : memref<8x1xf32, #tpu.memory_space<vmem>>, vector<8x1xf32>
      %15 = tpu.reciprocal %14 {approx = true} : vector<8x1xf32> -> vector<8x1xf32>
      %c0_6 = arith.constant 0 : index
      %c0_7 = arith.constant 0 : index
      %16 = vector.load %arg10[%c0_6, %c0_7] : memref<8x128xf32, #tpu.memory_space<vmem>>, vector<8x128xf32>
      %17 = vector.broadcast %15 : vector<8x1xf32> to vector<8x128xf32>
      %18 = arith.mulf %16, %17 : vector<8x128xf32>
      %c0_8 = arith.constant 0 : index
      %c0_9 = arith.constant 0 : index
      %c0_10 = arith.constant 0 : index
      %19 = vector.load %arg7[%c0_8, %c0_9, %c0_10] : memref<1x8x128xf32, #tpu.memory_space<vmem>>, vector<1x8x128xf32>
      %20 = vector.shape_cast %19 : vector<1x8x128xf32> to vector<8x128xf32>
      %21 = vector.shape_cast %18 : vector<8x128xf32> to vector<1x8x128xf32>
      tpu.vector_store %arg7[%c0_8, %c0_9, %c0_10], %21 {strides = array<i32>} : memref<1x8x128xf32, #tpu.memory_space<vmem>>, vector<1x8x128xf32>,
    } else {
    }
    return
  }
  func.func @transform_0(%arg0: i32, %arg1: i32, %arg2: i32, %arg3: memref<2xi32, #tpu.memory_space<smem>>) -> (i32, i32, i32) {
    %c0_i32 = arith.constant 0 : i32
    %c0_i32_0 = arith.constant 0 : i32
    return %arg0, %arg1, %c0_i32 : i32, i32, i32
  }
  func.func @transform_1(%arg0: i32, %arg1: i32, %arg2: i32, %arg3: memref<2xi32, #tpu.memory_space<smem>>) -> (i32, i32, i32) {
    %c0_i32 = arith.constant 0 : i32
    %c0_i32_0 = arith.constant 0 : i32
    return %arg0, %arg2, %c0_i32 : i32, i32, i32
  }
  func.func @transform_2(%arg0: i32, %arg1: i32, %arg2: i32, %arg3: memref<2xi32, #tpu.memory_space<smem>>) -> (i32, i32, i32) {
    %c0_i32 = arith.constant 0 : i32
    %c0_i32_0 = arith.constant 0 : i32
    return %arg0, %arg2, %c0_i32 : i32, i32, i32
  }
  func.func @transform_3(%arg0: i32, %arg1: i32, %arg2: i32, %arg3: memref<2xi32, #tpu.memory_space<smem>>) -> (i32, i32, i32) {
    %c0_i32 = arith.constant 0 : i32
    %c0_i32_0 = arith.constant 0 : i32
    return %arg0, %arg1, %c0_i32 : i32, i32, i32
  }
}

</mosaic_0001>

<llo_original>
// kernel: tpu_custom_call.1
$region0: #{tpu_custom_call.1}
  #allocation0 [shape = 'u32[]', space=smem, size = 0x4, offset = 0x4, fixed_abs, tag = 'smem constant byte address 0x4 - core index']
  #allocation1 [shape = 'u32[144,128]{1,0:T(1,128)}', space=vmem, size = 0x12000, scoped, tag = 'internal scratch']
  #allocation2 [shape = 'f32[8,1]{1,0:T(8,128)}', space=vmem, size = 0x1000, scoped, tag = 'scratch operand']
  #allocation3 [shape = 'f32[8,1]{1,0:T(8,128)}', space=vmem, size = 0x1000, scoped, tag = 'scratch operand']
  #allocation4 [shape = 'f32[8,128]{1,0:T(8,128)}', space=vmem, size = 0x1000, scoped, tag = 'scratch operand']
  #allocation5 [shape = 's32[1]{0}', space=sflag, size = 0x4, scoped, tag = 'scoped memory for tpu_custom_call.1']
  #allocation6 [shape = 'u8[512]{0}', space=smem, size = 0x200, scoped, tag = 'prefetched SMEM operand 0']
  %s0 = inlined_call_operand.hbm [shape: s32[2], index: 0, kind: input, shape index: {}]
  %s1 = inlined_call_operand.hbm [shape: f32[2,8,128], index: 1, kind: input, shape index: {}]
  %s2 = inlined_call_operand.hbm [shape: f32[2,16,128], index: 2, kind: input, shape index: {}]
  %s3 = inlined_call_operand.hbm [shape: f32[2,16,128], index: 3, kind: input, shape index: {}]
  %s4 = inlined_call_operand.hbm [shape: f32[2,8,128], index: 4, kind: output, shape index: {}]
  %s5 = sld [smem:[#allocation0]]
  $region69: #{tpu_custom_call.1} parent=0
    _
  %s7 = ssub.s32 1, %s5
  %s8 = scalar_select 0, %s7, %s5
  %10 = dma.hbm_to_smem %s0, 16, [#allocation6], [#allocation5]
  %11 = dma.done [#allocation5], 16
  %12 = sfence
  $region1: #{tpu_custom_call.1} parent=0
    #allocation7 [shape = 'u8[8192]{0}', space=vmem, size = 0x2000, scoped, tag = 'input window, operand 1']
    #allocation8 [shape = 's32[2]{0}', space=sflag, size = 0x8, scoped, tag = 'scoped memory for tpu_custom_call.1']
    #allocation9 [shape = 's32[2]{0}', space=sflag, size = 0x8, scoped, tag = 'scoped memory for tpu_custom_call.1']
    #allocation10 [shape = 'u8[16384]{0}', space=vmem, size = 0x4000, scoped, tag = 'input window, operand 2']
    #allocation11 [shape = 's32[2]{0}', space=sflag, size = 0x8, scoped, tag = 'scoped memory for tpu_custom_call.1']
    #allocation12 [shape = 'u8[16384]{0}', space=vmem, size = 0x4000, scoped, tag = 'input window, operand 3']
    #allocation13 [shape = 'u8[8192]{0}', space=vmem, size = 0x2000, scoped, tag = 'output window, operand 0']
    %13 = vsyncpa [#allocation8], 0
    %s14 = scalar_lea.sflag [#allocation8], 1
    %15 = vsyncpa %s14, 0
    %16 = vsyncpa [#allocation11], 0
    %s17 = scalar_lea.sflag [#allocation11], 1
    %18 = vsyncpa %s17, 0
    %19 = vsyncpa [#allocation9], 0
    %s20 = scalar_lea.sflag [#allocation9], 1
    %21 = vsyncpa %s20, 0
    loop: start=0, step=1, limit=4
    $region2: #{tpu_custom_call.1} parent=1 // loop_pre_header
      _
    $region3: #{tpu_custom_call.1} parent=1 // loop_header
      %s23 = sphi 0, %s27
      %p24 = scmp.ge.s32.totalorder %s23, 4
      %s30 = sphi 0, %s49
      %s31 = sphi 0, %s45
      %s32 = sphi 0, %s41
      %s33 = sphi 0, %s30
      %s34 = sphi 0, %s31
      %s35 = sphi 0, %s32
      %s36 = sphi 0, %s33
      %s37 = sphi 0, %s34
      %s38 = sphi 0, %s35
      %s54 = sphi 0, %s56
      %s57 = sphi 0, %s54
      %s58 = sphi 0, %s57
      %s74 = sphi 0, %s58
      %s82 = sphi 0, %s84
      %s85 = sphi 0, %s82
      %s86 = sphi 0, %s85
      %s102 = sphi 0, %s86
      %s110 = sphi 0, %s112
      %s113 = sphi 0, %s110
      %s114 = sphi 0, %s113
      %s130 = sphi 0, %s114
      %s138 = sphi 0, %s140
      %s141 = sphi 0, %s138
      %s142 = sphi 0, %s141
      %s158 = sphi 0, %s142
    $region4: #{tpu_custom_call.1} parent=1 // loop_header_branch
      %26 = sbr.rel (%p24) target = $region8
    $region5: #{tpu_custom_call.1} parent=1 // loop_body
      %s28 = ssub.s32 %s23, 1
      %s29 = ssub.s32 %s23, 2
      %s39 = sadd.s32 1, %s32
      %p40 = scmp.ge.s32.totalorder %s39, 1
      %s41 = scalar_select %p40, 0, %s39
      %s42 = sadd.s32 1, %s31
      %s43 = scalar_select %p40, %s42, %s31
      %p44 = scmp.ge.s32.totalorder %s43, 1
      %s45 = scalar_select %p44, 0, %s43
      %s46 = sadd.s32 1, %s30
      %s47 = scalar_select %p44, %s46, %s30
      %p48 = scmp.ge.s32.totalorder %s47, 2
      %s49 = scalar_select %p48, 0, %s47
      %s50 = ssub.s32 %s30, %s49
      %s51 = ssub.s32 %s31, %s45
      %s52 = sor.u32 %s50, %s51
      %p53 = scmp.eq.s32.totalorder %s52, 0
      %s55 = sadd.s32 %s54, 1
      %s56 = scalar_select %p53, %s54, %s55
      %p59 = pneg %p53
      %p60 = scmp.eq.s32.totalorder %s23, 1
      %p61 = por %p59, %p60
      %p62 = scmp.ne.s32.totalorder %s54, %s57
      %p63 = scmp.eq.s32.totalorder %s23, 0
      %p64 = por %p62, %p63
      %p65 = scmp.ne.s32.totalorder %s54, %s57
      %p66 = scmp.eq.s32.totalorder %s28, 1
      %p67 = por %p65, %p66
      %p68 = scmp.ne.s32.totalorder %s57, %s58
      %p69 = scmp.eq.s32.totalorder %s28, 0
      %p70 = por %p68, %p69
      %p71 = scmp.ne.s32.totalorder %s57, %s58
      %p72 = scmp.eq.s32.totalorder %s29, 1
      %p73 = por %p71, %p72
      %p75 = scmp.ne.s32.totalorder %s58, %s74
      %p76 = scmp.eq.s32.totalorder %s29, 0
      %p77 = por %p75, %p76
      %s78 = ssub.s32 %s30, %s49
      %s79 = ssub.s32 %s32, %s41
      %s80 = sor.u32 %s78, %s79
      %p81 = scmp.eq.s32.totalorder %s80, 0
      %s83 = sadd.s32 %s82, 1
      %s84 = scalar_select %p81, %s82, %s83
      %p87 = pneg %p81
      %p88 = scmp.eq.s32.totalorder %s23, 1
      %p89 = por %p87, %p88
      %p90 = scmp.ne.s32.totalorder %s82, %s85
      %p91 = scmp.eq.s32.totalorder %s23, 0
      %p92 = por %p90, %p91
      %p93 = scmp.ne.s32.totalorder %s82, %s85
      %p94 = scmp.eq.s32.totalorder %s28, 1
      %p95 = por %p93, %p94
      %p96 = scmp.ne.s32.totalorder %s85, %s86
      %p97 = scmp.eq.s32.totalorder %s28, 0
      %p98 = por %p96, %p97
      %p99 = scmp.ne.s32.totalorder %s85, %s86
      %p100 = scmp.eq.s32.totalorder %s29, 1
      %p101 = por %p99, %p100
      %p103 = scmp.ne.s32.totalorder %s86, %s102
      %p104 = scmp.eq.s32.totalorder %s29, 0
      %p105 = por %p103, %p104
      %s106 = ssub.s32 %s30, %s49
      %s107 = ssub.s32 %s32, %s41
      %s108 = sor.u32 %s106, %s107
      %p109 = scmp.eq.s32.totalorder %s108, 0
      %s111 = sadd.s32 %s110, 1
      %s112 = scalar_select %p109, %s110, %s111
      %p115 = pneg %p109
      %p116 = scmp.eq.s32.totalorder %s23, 1
      %p117 = por %p115, %p116
      %p118 = scmp.ne.s32.totalorder %s110, %s113
      %p119 = scmp.eq.s32.totalorder %s23, 0
      %p120 = por %p118, %p119
      %p121 = scmp.ne.s32.totalorder %s110, %s113
      %p122 = scmp.eq.s32.totalorder %s28, 1
      %p123 = por %p121, %p122
      %p124 = scmp.ne.s32.totalorder %s113, %s114
      %p125 = scmp.eq.s32.totalorder %s28, 0
      %p126 = por %p124, %p125
      %p127 = scmp.ne.s32.totalorder %s113, %s114
      %p128 = scmp.eq.s32.totalorder %s29, 1
      %p129 = por %p127, %p128
      %p131 = scmp.ne.s32.totalorder %s114, %s130
      %p132 = scmp.eq.s32.totalorder %s29, 0
      %p133 = por %p131, %p132
      %s134 = ssub.s32 %s30, %s49
      %s135 = ssub.s32 %s31, %s45
      %s136 = sor.u32 %s134, %s135
      %p137 = scmp.eq.s32.totalorder %s136, 0
      %s139 = sadd.s32 %s138, 1
      %s140 = scalar_select %p137, %s138, %s139
      %p143 = pneg %p137
      %p144 = scmp.eq.s32.totalorder %s23, 1
      %p145 = por %p143, %p144
      %p146 = scmp.ne.s32.totalorder %s138, %s141
      %p147 = scmp.eq.s32.totalorder %s23, 0
      %p148 = por %p146, %p147
      %p149 = scmp.ne.s32.totalorder %s138, %s141
      %p150 = scmp.eq.s32.totalorder %s28, 1
      %p151 = por %p149, %p150
      %p152 = scmp.ne.s32.totalorder %s141, %s142
      %p153 = scmp.eq.s32.totalorder %s28, 0
      %p154 = por %p152, %p153
      %p155 = scmp.ne.s32.totalorder %s141, %s142
      %p156 = scmp.eq.s32.totalorder %s29, 1
      %p157 = por %p155, %p156
      %p159 = scmp.ne.s32.totalorder %s142, %s158
      %p160 = scmp.eq.s32.totalorder %s29, 0
      %p161 = por %p159, %p160
      %p162 = scmp.le.s32.totalorder 1, %s23
      %p163 = scmp.lt.s32.totalorder %s23, 3
      %p164 = pnand %p162, %p163
      %p165 = pneg %p164
      // Predicated region
      $region9: #{tpu_custom_call.1} parent=5 // pred_check
        _
      $region10: #{tpu_custom_call.1} parent=5 // pred_check_branch
        %167 = sbr.rel (%p164) target = $region12
      $region11: #{tpu_custom_call.1} parent=5 // pred_region
        %s168 = ssub.s32 %s23, 1
      $region12: #{tpu_custom_call.1} parent=5 // pred_fallthru
        _
      %p169 = scmp.lt.s32.totalorder %s23, 2
      // Predicated region
      $region13: #{tpu_custom_call.1} parent=5 // pred_check
        %p170 = pneg %p169
      $region14: #{tpu_custom_call.1} parent=5 // pred_check_branch
        %172 = sbr.rel (%p170) target = $region16
      $region15: #{tpu_custom_call.1} parent=5 // pred_region
        // Predicated region
        $region17: #{tpu_custom_call.1} parent=15 // pred_check
          %p173 = pneg %p64
        $region18: #{tpu_custom_call.1} parent=15 // pred_check_branch
          %175 = sbr.rel (%p173) target = $region20
        $region19: #{tpu_custom_call.1} parent=15 // pred_region
          %s176 = sand.u32 %s54, 1
          %s177 = scalar_lea.sflag [#allocation8], %s176
          %s178 = sand.u32 %s54, 1
          %s179 = smul.addr %s178, 8
          %s180 = scalar_lea.vmem [#allocation7], %s179
          %s182 = ssub.s32 128, 128
          %183 = vsyncadd %s177, %s182
          %s184 = sadd.s32 %s31, %s30
          %s185 = smul.addr %s184, 128
          %s186 = scalar_lea.hbm %s1, %s185
          %s188 = sshll.u32 %s180, 4
          %s189 = int_to_ptr.vmem [resolvable:$true] %s188
          %191 = dma.hbm_to_vmem [thread:$0]  %s186, 128, %s189, %s177
        $region20: #{tpu_custom_call.1} parent=15 // pred_fallthru
          _
        // Predicated region
        $region21: #{tpu_custom_call.1} parent=15 // pred_check
          %p192 = pneg %p92
        $region22: #{tpu_custom_call.1} parent=15 // pred_check_branch
          %194 = sbr.rel (%p192) target = $region24
        $region23: #{tpu_custom_call.1} parent=15 // pred_region
          %s195 = sand.u32 %s23, 1
          %s196 = scalar_lea.sflag [#allocation11], %s195
          %s197 = sand.u32 %s82, 1
          %s198 = smul.addr %s197, 16
          %s199 = scalar_lea.vmem [#allocation10], %s198
          %s200 = smul.u32 2, %s32
          %s202 = ssub.s32 256, 256
          %203 = vsyncadd %s196, %s202
          %s204 = smul.addr %s30, 2
          %s205 = sadd.s32 %s200, %s204
          %s206 = smul.addr %s205, 128
          %s207 = scalar_lea.hbm %s2, %s206
          %s208 = sshll.u32 %s199, 4
          %s209 = int_to_ptr.vmem [resolvable:$true] %s208
          %214 = dma.hbm_to_vmem [thread:$0]  %s207, 256, %s209, %s196, 128, 128, 8
        $region24: #{tpu_custom_call.1} parent=15 // pred_fallthru
          _
        // Predicated region
        $region25: #{tpu_custom_call.1} parent=15 // pred_check
          %p215 = pneg %p120
        $region26: #{tpu_custom_call.1} parent=15 // pred_check_branch
          %217 = sbr.rel (%p215) target = $region28
        $region27: #{tpu_custom_call.1} parent=15 // pred_region
          %s218 = sand.u32 %s23, 1
          %s219 = scalar_lea.sflag [#allocation11], %s218
          %s220 = sand.u32 %s110, 1
          %s221 = smul.addr %s220, 16
          %s222 = scalar_lea.vmem [#allocation12], %s221
          %s223 = smul.u32 2, %s32
          %s225 = ssub.s32 256, 256
          %226 = vsyncadd %s219, %s225
          %s227 = smul.addr %s30, 2
          %s228 = sadd.s32 %s223, %s227
          %s229 = smul.addr %s228, 128
          %s230 = scalar_lea.hbm %s3, %s229
          %s231 = sshll.u32 %s222, 4
          %s232 = int_to_ptr.vmem [resolvable:$true] %s231
          %237 = dma.hbm_to_vmem [thread:$0]  %s230, 256, %s232, %s219, 128, 128, 8
        $region28: #{tpu_custom_call.1} parent=15 // pred_fallthru
          _
      $region16: #{tpu_custom_call.1} parent=5 // pred_fallthru
        _
      %p238 = scmp.le.s32.totalorder 1, %s23
      %p239 = scmp.lt.s32.totalorder %s23, 3
      %p240 = pnand %p238, %p239
      %p241 = pneg %p240
      // Predicated region
      $region29: #{tpu_custom_call.1} parent=5 // pred_check
        _
      $region30: #{tpu_custom_call.1} parent=5 // pred_check_branch
        %243 = sbr.rel (%p240) target = $region32
      $region31: #{tpu_custom_call.1} parent=5 // pred_region
        %s244 = ssub.s32 %s23, 1
        %s245 = sand.u32 %s57, 1
        %s246 = scalar_lea.sflag [#allocation8], %s245
        %s247 = sand.u32 %s57, 1
        %s248 = smul.addr %s247, 8
        %s249 = scalar_lea.vmem [#allocation7], %s248
        // Predicated region
        $region33: #{tpu_custom_call.1} parent=31 // pred_check
          %p250 = pneg %p70
        $region34: #{tpu_custom_call.1} parent=31 // pred_check_branch
          %252 = sbr.rel (%p250) target = $region36
        $region35: #{tpu_custom_call.1} parent=31 // pred_region
          %253 = dma.done %s246, 128
        $region36: #{tpu_custom_call.1} parent=31 // pred_fallthru
          _
        %s254 = sand.u32 %s28, 1
        %s255 = scalar_lea.sflag [#allocation11], %s254
        %s256 = sand.u32 %s85, 1
        %s257 = smul.addr %s256, 16
        %s258 = scalar_lea.vmem [#allocation10], %s257
        // Predicated region
        $region37: #{tpu_custom_call.1} parent=31 // pred_check
          %p259 = pneg %p98
        $region38: #{tpu_custom_call.1} parent=31 // pred_check_branch
          %261 = sbr.rel (%p259) target = $region40
        $region39: #{tpu_custom_call.1} parent=31 // pred_region
          %262 = dma.done %s255, 256
        $region40: #{tpu_custom_call.1} parent=31 // pred_fallthru
          _
        %s263 = sand.u32 %s28, 1
        %s264 = scalar_lea.sflag [#allocation11], %s263
        %s265 = sand.u32 %s113, 1
        %s266 = smul.addr %s265, 16
        %s267 = scalar_lea.vmem [#allocation12], %s266
        // Predicated region
        $region41: #{tpu_custom_call.1} parent=31 // pred_check
          %p268 = pneg %p126
        $region42: #{tpu_custom_call.1} parent=31 // pred_check_branch
          %270 = sbr.rel (%p268) target = $region44
        $region43: #{tpu_custom_call.1} parent=31 // pred_region
          %271 = dma.done %s264, 256
        $region44: #{tpu_custom_call.1} parent=31 // pred_fallthru
          _
        %s272 = sand.u32 %s57, 1
        %s273 = scalar_lea.sflag [#allocation8], %s272
        %s274 = sand.u32 %s57, 1
        %s275 = smul.addr %s274, 8
        %s276 = scalar_lea.vmem [#allocation7], %s275
        %p277 = pneg %p70
        %p278 = pneg %p67
        %s279 = sand.u32 %s28, 1
        %s280 = scalar_lea.sflag [#allocation11], %s279
        %s281 = sand.u32 %s85, 1
        %s282 = smul.addr %s281, 16
        %s283 = scalar_lea.vmem [#allocation10], %s282
        %p284 = pneg %p98
        %p285 = pneg %p95
        %s286 = sand.u32 %s28, 1
        %s287 = scalar_lea.sflag [#allocation11], %s286
        %s288 = sand.u32 %s113, 1
        %s289 = smul.addr %s288, 16
        %s290 = scalar_lea.vmem [#allocation12], %s289
        %p291 = pneg %p126
        %p292 = pneg %p123
        %p293 = pneg %p154
        %p294 = pneg %p151
        %s295 = sand.u32 %s141, 1
        %s296 = scalar_lea.sflag [#allocation9], %s295
        %s297 = sand.u32 %s141, 1
        %s298 = smul.addr %s297, 8
        %s299 = scalar_lea.vmem [#allocation13], %s298
        %s300 = smul.u32 2, %s35
        %s301 = smul.u32 2, %s35
        %p302 = scmp.eq.s32.totalorder %s35, 0
        // Predicated region
        $region45: #{tpu_custom_call.1} parent=31 // pred_check
          %p303 = pneg %p302
        $region46: #{tpu_custom_call.1} parent=31 // pred_check_branch
          %305 = sbr.rel (%p303) target = $region48
        $region47: #{tpu_custom_call.1} parent=31 // pred_region
          %vm306 = vcmask 7168
          %307 = vst.msk [vmem:[#allocation2] sm:$0xff] %vm306, -inf
          %308 = vst.msk [vmem:[#allocation3] sm:$0xff] %vm306, 0.0
          %309 = vst [vmem:[#allocation4] sm:$0xff] 0.0
        $region48: #{tpu_custom_call.1} parent=31 // pred_fallthru
          _
        %s310 = sld [smem:[#allocation6 + %s33]]
        %s311 = smul.u32 %s35, 16
        %p312 = scmp.lt.s32.totalorder %s311, %s310
        %p313 = scmp.le.s32.totalorder %s310, 0
        %p314 = por %p312, %p313
        // Predicated region
        $region49: #{tpu_custom_call.1} parent=31 // pred_check
          %p315 = pneg %p314
        $region50: #{tpu_custom_call.1} parent=31 // pred_check_branch
          %317 = sbr.rel (%p315) target = $region52
        $region51: #{tpu_custom_call.1} parent=31 // pred_region
          %v318 = vld [vmem:[%s249] sm:$0xff]
          %v319 = vld [vmem:[%s258] sm:$0xff]
          %v320 = vld [vmem:[%s258 + $0x8] sm:$0xff]
          %v321 = vld [vmem:[%s267] sm:$0xff]
          %v322 = vld [vmem:[%s267 + $0x8] sm:$0xff]
          %323 = vmatprep.subr.mxu0 0.0
          %324 = vmatpush1.xpose.msra.mxu0 %v319
          %325 = vmatprep.subr.mxu0 0.0
          %326 = vmatpush1.xpose.msra.mxu0 %v320
          %327 = vmatprep.subr.mxu0 0.0
          %328 = vmatpush1.xpose.msra.mxu0 0.0
          %329 = vmatprep.subr.mxu0 0.0
          %330 = vmatpush1.xpose.msra.mxu0 0.0
          %331 = vmatprep.subr.mxu0 0.0
          %332 = vmatpush1.xpose.msra.mxu0 0.0
          %333 = vmatprep.subr.mxu0 0.0
          %334 = vmatpush1.xpose.msra.mxu0 0.0
          %335 = vmatprep.subr.mxu0 0.0
          %336 = vmatpush1.xpose.msra.mxu0 0.0
          %337 = vmatprep.subr.mxu0 0.0
          %338 = vmatpush1.xpose.msra.mxu0 0.0
          %339 = vmatprep.subr.mxu0 0.0
          %340 = vmatpush1.xpose.msra.mxu0 0.0
          %341 = vmatprep.subr.mxu0 0.0
          %342 = vmatpush1.xpose.msra.mxu0 0.0
          %343 = vmatprep.subr.mxu0 0.0
          %344 = vmatpush1.xpose.msra.mxu0 0.0
          %345 = vmatprep.subr.mxu0 0.0
          %346 = vmatpush1.xpose.msra.mxu0 0.0
          %347 = vmatprep.subr.mxu0 0.0
          %348 = vmatpush1.xpose.msra.mxu0 0.0
          %349 = vmatprep.subr.mxu0 0.0
          %350 = vmatpush1.xpose.msra.mxu0 0.0
          %351 = vmatprep.subr.mxu0 0.0
          %352 = vmatpush1.xpose.msra.mxu0 0.0
          %353 = vmatprep.subr.mxu0 0.0
          %354 = vmatpush1.xpose.msra.mxu0 0.0
          %355 = vmatprep.subr.mxu0 0.0
          %356 = vmatpush1.xpose.msra.mxu0 0.0
          %357 = vmatprep.subr.mxu0 0.0
          %358 = vmatpush1.xpose.msra.mxu0 0.0
          %359 = vmatprep.subr.mxu0 0.0
          %360 = vmatpush1.xpose.msra.mxu0 0.0
          %361 = vmatprep.subr.mxu0 0.0
          %362 = vmatpush1.xpose.msra.mxu0 0.0
          %363 = vmatprep.subr.mxu0 0.0
          %364 = vmatpush1.xpose.msra.mxu0 0.0
          %365 = vmatprep.subr.mxu0 0.0
          %366 = vmatpush1.xpose.msra.mxu0 0.0
          %367 = vmatprep.subr.mxu0 0.0
          %368 = vmatpush1.xpose.msra.mxu0 0.0
          %369 = vmatprep.subr.mxu0 0.0
          %370 = vmatpush1.xpose.msra.mxu0 0.0
          %371 = vmatprep.subr.mxu0 0.0
          %372 = vmatpush1.xpose.msra.mxu0 0.0
          %373 = vmatprep.subr.mxu0 0.0
          %374 = vmatpush1.xpose.msra.mxu0 0.0
          %375 = vmatprep.subr.mxu0 0.0
          %376 = vmatpush1.xpose.msra.mxu0 0.0
          %377 = vmatprep.subr.mxu0 0.0
          %378 = vmatpush1.xpose.msra.mxu0 0.0
          %379 = vmatprep.subr.mxu0 0.0
          %380 = vmatpush1.xpose.msra.mxu0 0.0
          %381 = vmatprep.subr.mxu0 0.0
          %382 = vmatpush1.xpose.msra.mxu0 0.0
          %383 = vmatprep.subr.mxu0 0.0
          %384 = vmatpush1.xpose.msra.mxu0 0.0
          %385 = vmatprep.subr.mxu0 0.0
          %386 = vmatpush1.xpose.msra.mxu0 0.0
          %387 = vmatprep.mubr.f32.mxu0 0.0
          %388 = vmatmul.mubr.f32.gmra.mrb[0].mxu0 %v318
          %v389 = vpop.f32.mrb[0].mxu0
          %v390 = vadd.f32 0.0, %v389
          %v391 = vpop.f32.mrb[0].mxu0
          %392 = vdwg.mxu0
          %v393 = vmul.f32 %v390, 0.70710677
          %v394 = vlaneseq
          %v395 = vand.u32 %v394, 127
          %v396 = vstv %s311
          %v397 = vadd.s32 %v396, %v395
          %v398 = vstv %s310
          %vm399 = vcmp.lt.s32.totalorder %v397, %v398
          %v400 = vsel %vm399, %v393, -1000000.0
          %vm401 = vcmp.lt.s32.totalorder %v397, 10
          %v402 = vsel %vm401, %v400, -inf
          %v403 = vld [vmem:[#allocation2] sm:$0xff]
          %vm404 = vcmask 130048
          %v405 = vsel %vm404, %v402, -inf
          %406 = vmax.xlane.f32.xlu0 %v405
          %v407 = vpop.xlane.xlu0 %406
          %v408 = vmax.f32 %v403, %v407
          %v409 = vsub.f32 %v403, %v408
          %v410 = vmul.f32 %v409, 1.442695
          %v411 = vpow.pop %v410
          %413 = vset.pattern.permute.xlu0 0
          %414 = vperm.xlu0 %413, %v408
          %v415 = vpop.permute.xlu0 %414
          %v417 = vsub.f32 %v402, %v415
          %v418 = vmul.f32 %v417, 1.442695
          %v419 = vpow.pop %v418
          %v420 = vld [vmem:[#allocation3] sm:$0xff]
          %v421 = vmul.f32 %v411, %v420
          %v422 = vsel %vm404, %v419, 0.0
          %423 = vadd.xlane.f32.xlu0 %v422
          %v424 = vpop.xlane.xlu0 %423
          %v425 = vadd.f32 %v421, %v424
          %vm426 = vcmask 7168
          %427 = vst.msk [vmem:[#allocation3] sm:$0xff] %vm426, %v425
          %v428 = vld [vmem:[#allocation4] sm:$0xff]
          %430 = vset.pattern.permute.xlu0 0
          %431 = vperm.xlu0 %430, %v411
          %v432 = vpop.permute.xlu0 %431
          %v434 = vmul.f32 %v432, %v428
          %v436 = vsel %vm404, %v419, 0
          %438 = vmatprep.subr.mxu0 0.0
          %439 = vmatpush1.msra.mxu0 %v321
          %440 = vmatprep.subr.mxu0 0.0
          %441 = vmatpush1.msra.mxu0 %v322
          %442 = vmatprep.subr.mxu0 0.0
          %443 = vmatpush1.msra.mxu0 0.0
          %444 = vmatprep.subr.mxu0 0.0
          %445 = vmatpush1.msra.mxu0 0.0
          %446 = vmatprep.subr.mxu0 0.0
          %447 = vmatpush1.msra.mxu0 0.0
          %448 = vmatprep.subr.mxu0 0.0
          %449 = vmatpush1.msra.mxu0 0.0
          %450 = vmatprep.subr.mxu0 0.0
          %451 = vmatpush1.msra.mxu0 0.0
          %452 = vmatprep.subr.mxu0 0.0
          %453 = vmatpush1.msra.mxu0 0.0
          %454 = vmatprep.subr.mxu0 0.0
          %455 = vmatpush1.msra.mxu0 0.0
          %456 = vmatprep.subr.mxu0 0.0
          %457 = vmatpush1.msra.mxu0 0.0
          %458 = vmatprep.subr.mxu0 0.0
          %459 = vmatpush1.msra.mxu0 0.0
          %460 = vmatprep.subr.mxu0 0.0
          %461 = vmatpush1.msra.mxu0 0.0
          %462 = vmatprep.subr.mxu0 0.0
          %463 = vmatpush1.msra.mxu0 0.0
          %464 = vmatprep.subr.mxu0 0.0
          %465 = vmatpush1.msra.mxu0 0.0
          %466 = vmatprep.subr.mxu0 0.0
          %467 = vmatpush1.msra.mxu0 0.0
          %468 = vmatprep.subr.mxu0 0.0
          %469 = vmatpush1.msra.mxu0 0.0
          %470 = vmatprep.subr.mxu0 0.0
          %471 = vmatpush1.msra.mxu0 0.0
          %472 = vmatprep.subr.mxu0 0.0
          %473 = vmatpush1.msra.mxu0 0.0
          %474 = vmatprep.subr.mxu0 0.0
          %475 = vmatpush1.msra.mxu0 0.0
          %476 = vmatprep.subr.mxu0 0.0
          %477 = vmatpush1.msra.mxu0 0.0
          %478 = vmatprep.subr.mxu0 0.0
          %479 = vmatpush1.msra.mxu0 0.0
          %480 = vmatprep.subr.mxu0 0.0
          %481 = vmatpush1.msra.mxu0 0.0
          %482 = vmatprep.subr.mxu0 0.0
          %483 = vmatpush1.msra.mxu0 0.0
          %484 = vmatprep.subr.mxu0 0.0
          %485 = vmatpush1.msra.mxu0 0.0
          %486 = vmatprep.subr.mxu0 0.0
          %487 = vmatpush1.msra.mxu0 0.0
          %488 = vmatprep.subr.mxu0 0.0
          %489 = vmatpush1.msra.mxu0 0.0
          %490 = vmatprep.subr.mxu0 0.0
          %491 = vmatpush1.msra.mxu0 0.0
          %492 = vmatprep.subr.mxu0 0.0
          %493 = vmatpush1.msra.mxu0 0.0
          %494 = vmatprep.subr.mxu0 0.0
          %495 = vmatpush1.msra.mxu0 0.0
          %496 = vmatprep.subr.mxu0 0.0
          %497 = vmatpush1.msra.mxu0 0.0
          %498 = vmatprep.subr.mxu0 0.0
          %499 = vmatpush1.msra.mxu0 0.0
          %500 = vmatprep.subr.mxu0 0.0
          %501 = vmatpush1.msra.mxu0 0.0
          %502 = vmatprep.mubr.f32.mxu0 0.0
          %503 = vmatmul.mubr.f32.gmra.mrb[0].mxu0 %v436
          %v504 = vpop.f32.mrb[0].mxu0
          %v505 = vadd.f32 0.0, %v504
          %v506 = vpop.f32.mrb[0].mxu0
          %507 = vdwg.mxu0
          %v508 = vadd.f32 %v434, %v505
          %509 = vst [vmem:[#allocation4] sm:$0xff] %v508
          %510 = vst.msk [vmem:[#allocation2] sm:$0xff] %vm426, %v408
        $region52: #{tpu_custom_call.1} parent=31 // pred_fallthru
          _
        // Predicated region
        $region53: #{tpu_custom_call.1} parent=31 // pred_check
          %p511 = pneg %p302
        $region54: #{tpu_custom_call.1} parent=31 // pred_check_branch
          %513 = sbr.rel (%p511) target = $region56
        $region55: #{tpu_custom_call.1} parent=31 // pred_region
          %v514 = vld [vmem:[#allocation3] sm:$0xff]
          %v515 = vrcp.pop %v514
          %v516 = vld [vmem:[#allocation4] sm:$0xff]
          %518 = vset.pattern.permute.xlu0 0
          %519 = vperm.xlu0 %518, %v515
          %v520 = vpop.permute.xlu0 %519
          %v522 = vmul.f32 %v516, %v520
          %523 = vst [vmem:[%s299] sm:$0xff] %v522
        $region56: #{tpu_custom_call.1} parent=31 // pred_fallthru
          _
        %s524 = sand.u32 %s141, 1
        %s525 = scalar_lea.sflag [#allocation9], %s524
        %s526 = sand.u32 %s141, 1
        %s527 = smul.addr %s526, 8
        %s528 = scalar_lea.vmem [#allocation13], %s527
        // Predicated region
        $region57: #{tpu_custom_call.1} parent=31 // pred_check
          %p529 = pneg %p151
        $region58: #{tpu_custom_call.1} parent=31 // pred_check_branch
          %531 = sbr.rel (%p529) target = $region60
        $region59: #{tpu_custom_call.1} parent=31 // pred_region
          %s533 = ssub.s32 128, 128
          %534 = vsyncadd %s525, %s533
          %s535 = sadd.s32 %s34, %s33
          %s536 = smul.addr %s535, 128
          %s537 = scalar_lea.hbm %s4, %s536
          %s539 = sshll.u32 %s528, 4
          %s540 = int_to_ptr.vmem [resolvable:$true] %s539
          %542 = dma.vmem_to_hbm [thread:$0]  %s540, 128, %s537, %s525
        $region60: #{tpu_custom_call.1} parent=31 // pred_fallthru
          _
      $region32: #{tpu_custom_call.1} parent=5 // pred_fallthru
        _
      %p543 = scmp.le.s32.totalorder 2, %s23
      // Predicated region
      $region61: #{tpu_custom_call.1} parent=5 // pred_check
        %p544 = pneg %p543
      $region62: #{tpu_custom_call.1} parent=5 // pred_check_branch
        %546 = sbr.rel (%p544) target = $region64
      $region63: #{tpu_custom_call.1} parent=5 // pred_region
        %s547 = ssub.s32 %s23, 2
        // Predicated region
        $region65: #{tpu_custom_call.1} parent=63 // pred_check
          %p548 = pneg %p157
        $region66: #{tpu_custom_call.1} parent=63 // pred_check_branch
          %550 = sbr.rel (%p548) target = $region68
        $region67: #{tpu_custom_call.1} parent=63 // pred_region
          %s551 = sand.u32 %s142, 1
          %s552 = scalar_lea.sflag [#allocation9], %s551
          %s553 = sand.u32 %s142, 1
          %s554 = smul.addr %s553, 8
          %s555 = scalar_lea.vmem [#allocation13], %s554
          %556 = dma.done %s552, 128
        $region68: #{tpu_custom_call.1} parent=63 // pred_fallthru
          _
      $region64: #{tpu_custom_call.1} parent=5 // pred_fallthru
        _
    $region6: #{tpu_custom_call.1} parent=1 // loop_footer
      %s27 = sadd.s32 1, %s23
    $region7: #{tpu_custom_call.1} parent=1 // loop_footer_branch
      %22 = sbr.rel target = $region3
    $region8: #{tpu_custom_call.1} parent=1 // loop_exit
      _
    %557 = vsyncpa [#allocation8], 1
    %s558 = scalar_lea.sflag [#allocation8], 1
    %559 = vsyncpa %s558, 1
    %560 = vsyncpa [#allocation11], 1
    %s561 = scalar_lea.sflag [#allocation11], 1
    %562 = vsyncpa %s561, 1
    %563 = vsyncpa [#allocation9], 1
    %s564 = scalar_lea.sflag [#allocation9], 1
    %565 = vsyncpa %s564, 1

</llo_original>
